<compile_context>
chip_gen: v7x
topology: tpu7x:2x2x1
jax: 0.10.0
libtpu: 0.0.40
codegen_flags: <defaults>
</compile_context>

<pallas_src>
import jax
import jax.numpy as jnp
import numpy as np
from jax.experimental import pallas as pl
from jax.experimental.pallas import tpu as pltpu

BN_EPS = 1e-5


def gate_kernel(x_ref, w_ref, b_ref, o_ref):
    """y[b, g] = tanh( sum_f x[b, f] * w_fold[g, f] + b_fold[g] ).

    x_ref : (B, Fp)  f32, VMEM (full array; Fp is 128-aligned, zero padded)
    w_ref : (G, Fp)  f32, VMEM (BN scale folded in; padded columns are zero)
    b_ref : (1, G)   f32, SMEM (folded BN bias)
    o_ref : (B, G)   f32, VMEM
    """
    x = x_ref[...]                                       # (B, Fp)
    ngates = w_ref.shape[0]
    # ngates is tiny & static -> unrolled Python loop.  Each gate is an
    # elementwise multiply (VALU) + cross-lane reduce (XLU).  No MXU, no
    # padded weight stream.
    accs = []
    for g in range(ngates):
        w_g = w_ref[g:g + 1, :]                          # (1, Fp)
        acc = jnp.sum(x * w_g, axis=-1, keepdims=True)   # (B, 1) f32
        accs.append(acc + b_ref[0, g])
    z = accs[0] if ngates == 1 else jnp.concatenate(accs, axis=-1)
    # Single lane-dense-as-possible store + tanh (EUP).
    o_ref[...] = jnp.tanh(z).astype(o_ref.dtype)


def prepare_gate_params(w, gamma, beta, running_mean, running_var, eps=BN_EPS):
    """One-time (init) prep: fold eval-mode BatchNorm into Linear weight/bias
    and zero-pad the feature axis to a multiple of 128.

    w: (ngates, F) -- PyTorch nn.Linear weight layout.
    Returns: w_fold (ngates, Fp) f32, b_fold (1, ngates) f32.
    """
    ngates, F = w.shape
    scale = gamma.astype(jnp.float32) * jax.lax.rsqrt(
        running_var.astype(jnp.float32) + eps)                   # (G,)
    w_fold = w.astype(jnp.float32) * scale[:, None]              # (G, F)
    b_fold = (beta.astype(jnp.float32)
              - running_mean.astype(jnp.float32) * scale)        # (G,)

    Fp = ((F + 127) // 128) * 128
    w_pad = jnp.zeros((ngates, Fp), jnp.float32).at[:, :F].set(w_fold)
    return w_pad, b_fold.reshape(1, ngates)


def gate_forward(x, w_fold, b_fold):
    """x: (B, F); w_fold: (G, Fp) f32 (pre-folded/padded); b_fold: (1, G)."""
    B, F = x.shape
    G, Fp = w_fold.shape

    # Only per-call prep: pad the reduced lane axis to 128 alignment.  Padded
    # weight columns are zero, so the pad value of x is irrelevant.
    x_p = jnp.pad(x.astype(jnp.float32), ((0, 0), (0, Fp - F)))

    out = pl.pallas_call(
        gate_kernel,
        out_shape=jax.ShapeDtypeStruct((B, G), jnp.float32),
        in_specs=[
            pl.BlockSpec(memory_space=pltpu.MemorySpace.VMEM),   # x (full)
            pl.BlockSpec(memory_space=pltpu.MemorySpace.VMEM),   # w_fold (full)
            pl.BlockSpec(memory_space=pltpu.MemorySpace.SMEM),   # b_fold
        ],
        out_specs=pl.BlockSpec(memory_space=pltpu.MemorySpace.VMEM),
    )(x_p, w_fold, b_fold)
    return out


if __name__ == "__main__":
    # Shapes consistent with the module: Linear(in_ch * 3249, ngates).
    in_ch, ngates, batch = 4, 1, 2
    feats = in_ch * 3249  # 12996

    key = jax.random.PRNGKey(0)
    kx, kw, kg, kb, km, kv = jax.random.split(key, 6)

    x = jax.random.normal(kx, (batch, feats), jnp.float32)

    # kaiming_normal_ on Linear weight (ngates, feats): std = sqrt(2 / fan_in)
    std = float(np.sqrt(2.0 / feats))
    w = jax.random.normal(kw, (ngates, feats), jnp.float32) * std

    # Non-trivial BatchNorm1d(ngates) affine params / running stats (eval
    # mode) so the BN folding is actually exercised.
    gamma = 1.0 + 0.1 * jax.random.normal(kg, (ngates,), jnp.float32)
    beta = 0.1 * jax.random.normal(kb, (ngates,), jnp.float32)
    running_mean = 0.1 * jax.random.normal(km, (ngates,), jnp.float32)
    running_var = jnp.abs(
        1.0 + 0.1 * jax.random.normal(kv, (ngates,), jnp.float32))

    # One-time parameter prep (init): fold BN, pad weight.
    w_fold, b_fold = prepare_gate_params(
        w, gamma, beta, running_mean, running_var)

    out = jax.block_until_ready(gate_forward(x, w_fold, b_fold))

    # Pure-JAX reference (unfused, full-precision matmul).
    z = jnp.einsum("bf,gf->bg", x, w, precision=jax.lax.Precision.HIGHEST)
    ref = jnp.tanh((z - running_mean[None, :])
                   * jax.lax.rsqrt(running_var[None, :] + BN_EPS)
                   * gamma[None, :] + beta[None, :])
    np.testing.assert_allclose(np.asarray(out), np.asarray(ref),
                               rtol=1e-4, atol=1e-4)

    assert out.shape == (batch, ngates)
    print("KERNEL_OK")
</pallas_src>

<mosaic_0001>
module attributes {stable_mosaic.version = 11 : i64} {
  func.func @gate_kernel(%arg0: memref<2x13056xf32, #tpu.memory_space<vmem>>, %arg1: memref<1x13056xf32, #tpu.memory_space<vmem>>, %arg2: memref<1x1xf32, #tpu.memory_space<smem>>, %arg3: memref<2x1xf32, #tpu.memory_space<vmem>>) attributes {dimension_semantics = [], scalar_prefetch = 0 : i64, scratch_operands = 0 : i64, tpu.core_type = #tpu.core_type<tc>} {
    %c0 = arith.constant 0 : index
    %c0_0 = arith.constant 0 : index
    %0 = vector.load %arg0[%c0, %c0_0] : memref<2x13056xf32, #tpu.memory_space<vmem>>, vector<2x13056xf32>
    %c0_1 = arith.constant 0 : index
    %c0_2 = arith.constant 0 : index
    %1 = vector.load %arg1[%c0_1, %c0_2] : memref<1x13056xf32, #tpu.memory_space<vmem>>, vector<1x13056xf32>
    %2 = vector.broadcast %1 : vector<1x13056xf32> to vector<2x13056xf32>
    %3 = arith.mulf %0, %2 : vector<2x13056xf32>
    %cst = arith.constant dense<0.000000e+00> : vector<2xf32>
    %4 = vector.multi_reduction <add>, %3, %cst [1] : vector<2x13056xf32> to vector<2xf32>
    %5 = vector.shape_cast %4 : vector<2xf32> to vector<2x1xf32>
    %c0_3 = arith.constant 0 : index
    %c0_4 = arith.constant 0 : index
    %6 = memref.load %arg2[%c0_3, %c0_4] : memref<1x1xf32, #tpu.memory_space<smem>>
    %7 = vector.broadcast %6 : f32 to vector<2x1xf32>
    %8 = arith.addf %5, %7 : vector<2x1xf32>
    %9 = math.tanh %8 : vector<2x1xf32>
    %c0_5 = arith.constant 0 : index
    %c0_6 = arith.constant 0 : index
    %10 = vector.load %arg3[%c0_5, %c0_6] : memref<2x1xf32, #tpu.memory_space<vmem>>, vector<2x1xf32>
    tpu.vector_store %arg3[%c0_5, %c0_6], %9 {strides = array<i32>} : memref<2x1xf32, #tpu.memory_space<vmem>>, vector<2x1xf32>,
    return
  }
}

</mosaic_0001>

<llo_original>
// kernel: tpu_custom_call.1
$region0: #{tpu_custom_call.1}
  #allocation0 [shape = 'u32[]', space=smem, size = 0x4, offset = 0x4, fixed_abs, tag = 'smem constant byte address 0x4 - core index']
  #allocation1 [shape = 'u32[144,128]{1,0:T(1,128)}', space=vmem, size = 0x12000, scoped, tag = 'internal scratch']
  #allocation2 [shape = 'f32[1,1]{1,0:T(1,128)S(6)}', space=smem, size = 0x200, scoped, tag = 'scoped memory for tpu_custom_call.1']
  %s0 = inlined_call_operand.hbm [shape: f32[2,13056], index: 0, kind: input, shape index: {}]
  %s1 = inlined_call_operand.hbm [shape: f32[1,13056], index: 1, kind: input, shape index: {}]
  %s2 = inlined_call_operand.<no memory space> [shape: f32[1,1], index: 2, kind: input, shape index: {}]
  %s3 = inlined_call_operand.vmem [shape: f32[2,1], index: 3, kind: output, shape index: {}]
  %s4 = sld [smem:[#allocation0]]
  $region30: #{tpu_custom_call.1} parent=0
    _
  %s6 = ssub.s32 1, %s4
  %s7 = scalar_select 0, %s6, %s4
  %8 = sst [smem:[#allocation2]] %s2
  $region1: #{tpu_custom_call.1} parent=0
    #allocation3 [shape = 'u8[104448]{0}', space=vmem, size = 0x19800, scoped, tag = 'input window, operand 0, single buffered']
    #allocation4 [shape = 's32[1]{0}', space=sflag, size = 0x4, scoped, tag = 'scoped memory for tpu_custom_call.1']
    #allocation5 [shape = 'u8[52224]{0}', space=vmem, size = 0xcc00, scoped, tag = 'input window, operand 1, single buffered']
    #allocation6 [shape = 's32[1]{0}', space=sflag, size = 0x4, scoped, tag = 'scoped memory for tpu_custom_call.1']
    %9 = vsyncpa [#allocation4], 0
    %10 = vsyncpa [#allocation6], 0
    // Predicated region
    $region2: #{tpu_custom_call.1} parent=1 // pred_check
      _
    $region3: #{tpu_custom_call.1} parent=1 // pred_check_branch
      %12 = sbr.rel (0) target = $region5
    $region4: #{tpu_custom_call.1} parent=1 // pred_region
      %s14 = ssub.s32 3264, 3264
      %15 = vsyncadd [#allocation4], %s14
      %s17 = sshll.u32 [#allocation3], 4
      %s18 = int_to_ptr.vmem [resolvable:$true] %s17
      %20 = dma.hbm_to_vmem [thread:$0]  %s0, 3264, %s18, [#allocation4]
    $region5: #{tpu_custom_call.1} parent=1 // pred_fallthru
      _
    // Predicated region
    $region6: #{tpu_custom_call.1} parent=1 // pred_check
      _
    $region7: #{tpu_custom_call.1} parent=1 // pred_check_branch
      %22 = sbr.rel (0) target = $region9
    $region8: #{tpu_custom_call.1} parent=1 // pred_region
      %s24 = ssub.s32 1632, 1632
      %25 = vsyncadd [#allocation6], %s24
      %s27 = sshll.u32 [#allocation5], 4
      %s28 = int_to_ptr.vmem [resolvable:$true] %s27
      %30 = dma.hbm_to_vmem [thread:$0]  %s1, 1632, %s28, [#allocation6]
    $region9: #{tpu_custom_call.1} parent=1 // pred_fallthru
      _
    // Predicated region
    $region10: #{tpu_custom_call.1} parent=1 // pred_check
      _
    $region11: #{tpu_custom_call.1} parent=1 // pred_check_branch
      %32 = sbr.rel (0) target = $region13
    $region12: #{tpu_custom_call.1} parent=1 // pred_region
      _
    $region13: #{tpu_custom_call.1} parent=1 // pred_fallthru
      _
    // Predicated region
    $region14: #{tpu_custom_call.1} parent=1 // pred_check
      _
    $region15: #{tpu_custom_call.1} parent=1 // pred_check_branch
      %34 = sbr.rel (0) target = $region17
    $region16: #{tpu_custom_call.1} parent=1 // pred_region
      %35 = dma.done [#allocation4], 3264
    $region17: #{tpu_custom_call.1} parent=1 // pred_fallthru
      _
    // Predicated region
    $region18: #{tpu_custom_call.1} parent=1 // pred_check
      _
    $region19: #{tpu_custom_call.1} parent=1 // pred_check_branch
      %37 = sbr.rel (0) target = $region21
    $region20: #{tpu_custom_call.1} parent=1 // pred_region
      %38 = dma.done [#allocation6], 1632
    $region21: #{tpu_custom_call.1} parent=1 // pred_fallthru
      _
    %v39 = vld [vmem:[#allocation3] sm:$0xff]
    %v40 = vld [vmem:[#allocation3 + $0x8] sm:$0xff]
    %v41 = vld [vmem:[#allocation3 + $0x10] sm:$0xff]
    %v42 = vld [vmem:[#allocation3 + $0x18] sm:$0xff]
    %v43 = vld [vmem:[#allocation3 + $0x20] sm:$0xff]
    %v44 = vld [vmem:[#allocation3 + $0x28] sm:$0xff]
    %v45 = vld [vmem:[#allocation3 + $0x30] sm:$0xff]
    %v46 = vld [vmem:[#allocation3 + $0x38] sm:$0xff]
    %v47 = vld [vmem:[#allocation3 + $0x40] sm:$0xff]
    %v48 = vld [vmem:[#allocation3 + $0x48] sm:$0xff]
    %v49 = vld [vmem:[#allocation3 + $0x50] sm:$0xff]
    %v50 = vld [vmem:[#allocation3 + $0x58] sm:$0xff]
    %v51 = vld [vmem:[#allocation3 + $0x60] sm:$0xff]
    %v52 = vld [vmem:[#allocation3 + $0x68] sm:$0xff]
    %v53 = vld [vmem:[#allocation3 + $0x70] sm:$0xff]
    %v54 = vld [vmem:[#allocation3 + $0x78] sm:$0xff]
    %v55 = vld [vmem:[#allocation3 + $0x80] sm:$0xff]
    %v56 = vld [vmem:[#allocation3 + $0x88] sm:$0xff]
    %v57 = vld [vmem:[#allocation3 + $0x90] sm:$0xff]
    %v58 = vld [vmem:[#allocation3 + $0x98] sm:$0xff]
    %v59 = vld [vmem:[#allocation3 + $0xa0] sm:$0xff]
    %v60 = vld [vmem:[#allocation3 + $0xa8] sm:$0xff]
    %v61 = vld [vmem:[#allocation3 + $0xb0] sm:$0xff]
    %v62 = vld [vmem:[#allocation3 + $0xb8] sm:$0xff]
    %v63 = vld [vmem:[#allocation3 + $0xc0] sm:$0xff]
    %v64 = vld [vmem:[#allocation3 + $0xc8] sm:$0xf]
    %v65 = vld [vmem:[#allocation5] sm:$0xff]
    %v66 = vld [vmem:[#allocation5 + $0x8] sm:$0xff]
    %v67 = vld [vmem:[#allocation5 + $0x10] sm:$0xff]
    %v68 = vld [vmem:[#allocation5 + $0x18] sm:$0xff]
    %v69 = vld [vmem:[#allocation5 + $0x20] sm:$0xff]
    %v70 = vld [vmem:[#allocation5 + $0x28] sm:$0xff]
    %v71 = vld [vmem:[#allocation5 + $0x30] sm:$0xff]
    %v72 = vld [vmem:[#allocation5 + $0x38] sm:$0xff]
    %v73 = vld [vmem:[#allocation5 + $0x40] sm:$0xff]
    %v74 = vld [vmem:[#allocation5 + $0x48] sm:$0xff]
    %v75 = vld [vmem:[#allocation5 + $0x50] sm:$0xff]
    %v76 = vld [vmem:[#allocation5 + $0x58] sm:$0xff]
    %v77 = vld [vmem:[#allocation5 + $0x60] sm:$0x3f]
    %v91 = vlaneseq
    %v92 = vshrl.u32 %v91, 7
    %v93 = vsub.s32 0, %v92
    %v94 = vrot.slane %v65, %v93
    %v95 = vlaneseq
    %v96 = vshrl.u32 %v95, 7
    %v97 = vsub.s32 1, %v96
    %v98 = vrot.slane %v65, %v97
    %v99 = vlaneseq
    %v100 = vshrl.u32 %v99, 7
    %v101 = vsub.s32 2, %v100
    %v102 = vrot.slane %v65, %v101
    %v103 = vlaneseq
    %v104 = vshrl.u32 %v103, 7
    %v105 = vsub.s32 3, %v104
    %v106 = vrot.slane %v65, %v105
    %v107 = vlaneseq
    %v108 = vshrl.u32 %v107, 7
    %v109 = vsub.s32 4, %v108
    %v110 = vrot.slane %v65, %v109
    %v111 = vlaneseq
    %v112 = vshrl.u32 %v111, 7
    %v113 = vsub.s32 5, %v112
    %v114 = vrot.slane %v65, %v113
    %v115 = vlaneseq
    %v116 = vshrl.u32 %v115, 7
    %v117 = vsub.s32 6, %v116
    %v118 = vrot.slane %v65, %v117
    %v119 = vlaneseq
    %v120 = vshrl.u32 %v119, 7
    %v121 = vsub.s32 7, %v120
    %v122 = vrot.slane %v65, %v121
    %v123 = vlaneseq
    %v124 = vshrl.u32 %v123, 7
    %v125 = vsub.s32 0, %v124
    %v126 = vrot.slane %v66, %v125
    %v127 = vlaneseq
    %v128 = vshrl.u32 %v127, 7
    %v129 = vsub.s32 1, %v128
    %v130 = vrot.slane %v66, %v129
    %v131 = vlaneseq
    %v132 = vshrl.u32 %v131, 7
    %v133 = vsub.s32 2, %v132
    %v134 = vrot.slane %v66, %v133
    %v135 = vlaneseq
    %v136 = vshrl.u32 %v135, 7
    %v137 = vsub.s32 3, %v136
    %v138 = vrot.slane %v66, %v137
    %v139 = vlaneseq
    %v140 = vshrl.u32 %v139, 7
    %v141 = vsub.s32 4, %v140
    %v142 = vrot.slane %v66, %v141
    %v143 = vlaneseq
    %v144 = vshrl.u32 %v143, 7
    %v145 = vsub.s32 5, %v144
    %v146 = vrot.slane %v66, %v145
    %v147 = vlaneseq
    %v148 = vshrl.u32 %v147, 7
    %v149 = vsub.s32 6, %v148
    %v150 = vrot.slane %v66, %v149
    %v151 = vlaneseq
    %v152 = vshrl.u32 %v151, 7
    %v153 = vsub.s32 7, %v152
    %v154 = vrot.slane %v66, %v153
    %v155 = vlaneseq
    %v156 = vshrl.u32 %v155, 7
    %v157 = vsub.s32 0, %v156
    %v158 = vrot.slane %v67, %v157
    %v159 = vlaneseq
    %v160 = vshrl.u32 %v159, 7
    %v161 = vsub.s32 1, %v160
    %v162 = vrot.slane %v67, %v161
    %v163 = vlaneseq
    %v164 = vshrl.u32 %v163, 7
    %v165 = vsub.s32 2, %v164
    %v166 = vrot.slane %v67, %v165
    %v167 = vlaneseq
    %v168 = vshrl.u32 %v167, 7
    %v169 = vsub.s32 3, %v168
    %v170 = vrot.slane %v67, %v169
    %v171 = vlaneseq
    %v172 = vshrl.u32 %v171, 7
    %v173 = vsub.s32 4, %v172
    %v174 = vrot.slane %v67, %v173
    %v175 = vlaneseq
    %v176 = vshrl.u32 %v175, 7
    %v177 = vsub.s32 5, %v176
    %v178 = vrot.slane %v67, %v177
    %v179 = vlaneseq
    %v180 = vshrl.u32 %v179, 7
    %v181 = vsub.s32 6, %v180
    %v182 = vrot.slane %v67, %v181
    %v183 = vlaneseq
    %v184 = vshrl.u32 %v183, 7
    %v185 = vsub.s32 7, %v184
    %v186 = vrot.slane %v67, %v185
    %v187 = vlaneseq
    %v188 = vshrl.u32 %v187, 7
    %v189 = vsub.s32 0, %v188
    %v190 = vrot.slane %v68, %v189
    %v191 = vlaneseq
    %v192 = vshrl.u32 %v191, 7
    %v193 = vsub.s32 1, %v192
    %v194 = vrot.slane %v68, %v193
    %v195 = vlaneseq
    %v196 = vshrl.u32 %v195, 7
    %v197 = vsub.s32 2, %v196
    %v198 = vrot.slane %v68, %v197
    %v199 = vlaneseq
    %v200 = vshrl.u32 %v199, 7
    %v201 = vsub.s32 3, %v200
    %v202 = vrot.slane %v68, %v201
    %v203 = vlaneseq
    %v204 = vshrl.u32 %v203, 7
    %v205 = vsub.s32 4, %v204
    %v206 = vrot.slane %v68, %v205
    %v207 = vlaneseq
    %v208 = vshrl.u32 %v207, 7
    %v209 = vsub.s32 5, %v208
    %v210 = vrot.slane %v68, %v209
    %v211 = vlaneseq
    %v212 = vshrl.u32 %v211, 7
    %v213 = vsub.s32 6, %v212
    %v214 = vrot.slane %v68, %v213
    %v215 = vlaneseq
    %v216 = vshrl.u32 %v215, 7
    %v217 = vsub.s32 7, %v216
    %v218 = vrot.slane %v68, %v217
    %v219 = vlaneseq
    %v220 = vshrl.u32 %v219, 7
    %v221 = vsub.s32 0, %v220
    %v222 = vrot.slane %v69, %v221
    %v223 = vlaneseq
    %v224 = vshrl.u32 %v223, 7
    %v225 = vsub.s32 1, %v224
    %v226 = vrot.slane %v69, %v225
    %v227 = vlaneseq
    %v228 = vshrl.u32 %v227, 7
    %v229 = vsub.s32 2, %v228
    %v230 = vrot.slane %v69, %v229
    %v231 = vlaneseq
    %v232 = vshrl.u32 %v231, 7
    %v233 = vsub.s32 3, %v232
    %v234 = vrot.slane %v69, %v233
    %v235 = vlaneseq
    %v236 = vshrl.u32 %v235, 7
    %v237 = vsub.s32 4, %v236
    %v238 = vrot.slane %v69, %v237
    %v239 = vlaneseq
    %v240 = vshrl.u32 %v239, 7
    %v241 = vsub.s32 5, %v240
    %v242 = vrot.slane %v69, %v241
    %v243 = vlaneseq
    %v244 = vshrl.u32 %v243, 7
    %v245 = vsub.s32 6, %v244
    %v246 = vrot.slane %v69, %v245
    %v247 = vlaneseq
    %v248 = vshrl.u32 %v247, 7
    %v249 = vsub.s32 7, %v248
    %v250 = vrot.slane %v69, %v249
    %v251 = vlaneseq
    %v252 = vshrl.u32 %v251, 7
    %v253 = vsub.s32 0, %v252
    %v254 = vrot.slane %v70, %v253
    %v255 = vlaneseq
    %v256 = vshrl.u32 %v255, 7
    %v257 = vsub.s32 1, %v256
    %v258 = vrot.slane %v70, %v257
    %v259 = vlaneseq
    %v260 = vshrl.u32 %v259, 7
    %v261 = vsub.s32 2, %v260
    %v262 = vrot.slane %v70, %v261
    %v263 = vlaneseq
    %v264 = vshrl.u32 %v263, 7
    %v265 = vsub.s32 3, %v264
    %v266 = vrot.slane %v70, %v265
    %v267 = vlaneseq
    %v268 = vshrl.u32 %v267, 7
    %v269 = vsub.s32 4, %v268
    %v270 = vrot.slane %v70, %v269
    %v271 = vlaneseq
    %v272 = vshrl.u32 %v271, 7
    %v273 = vsub.s32 5, %v272
    %v274 = vrot.slane %v70, %v273
    %v275 = vlaneseq
    %v276 = vshrl.u32 %v275, 7
    %v277 = vsub.s32 6, %v276
    %v278 = vrot.slane %v70, %v277
    %v279 = vlaneseq
    %v280 = vshrl.u32 %v279, 7
    %v281 = vsub.s32 7, %v280
    %v282 = vrot.slane %v70, %v281
    %v283 = vlaneseq
    %v284 = vshrl.u32 %v283, 7
    %v285 = vsub.s32 0, %v284
    %v286 = vrot.slane %v71, %v285
    %v287 = vlaneseq
    %v288 = vshrl.u32 %v287, 7
    %v289 = vsub.s32 1, %v288
    %v290 = vrot.slane %v71, %v289
    %v291 = vlaneseq
    %v292 = vshrl.u32 %v291, 7
    %v293 = vsub.s32 2, %v292
    %v294 = vrot.slane %v71, %v293
    %v295 = vlaneseq
    %v296 = vshrl.u32 %v295, 7
    %v297 = vsub.s32 3, %v296
    %v298 = vrot.slane %v71, %v297
    %v299 = vlaneseq
    %v300 = vshrl.u32 %v299, 7
    %v301 = vsub.s32 4, %v300
    %v302 = vrot.slane %v71, %v301
    %v303 = vlaneseq
    %v304 = vshrl.u32 %v303, 7
    %v305 = vsub.s32 5, %v304
    %v306 = vrot.slane %v71, %v305
    %v307 = vlaneseq
    %v308 = vshrl.u32 %v307, 7
    %v309 = vsub.s32 6, %v308
    %v310 = vrot.slane %v71, %v309
    %v311 = vlaneseq
    %v312 = vshrl.u32 %v311, 7
    %v313 = vsub.s32 7, %v312
    %v314 = vrot.slane %v71, %v313
    %v315 = vlaneseq
    %v316 = vshrl.u32 %v315, 7
    %v317 = vsub.s32 0, %v316
    %v318 = vrot.slane %v72, %v317
    %v319 = vlaneseq
    %v320 = vshrl.u32 %v319, 7
    %v321 = vsub.s32 1, %v320
    %v322 = vrot.slane %v72, %v321
    %v323 = vlaneseq
    %v324 = vshrl.u32 %v323, 7
    %v325 = vsub.s32 2, %v324
    %v326 = vrot.slane %v72, %v325
    %v327 = vlaneseq
    %v328 = vshrl.u32 %v327, 7
    %v329 = vsub.s32 3, %v328
    %v330 = vrot.slane %v72, %v329
    %v331 = vlaneseq
    %v332 = vshrl.u32 %v331, 7
    %v333 = vsub.s32 4, %v332
    %v334 = vrot.slane %v72, %v333
    %v335 = vlaneseq
    %v336 = vshrl.u32 %v335, 7
    %v337 = vsub.s32 5, %v336
    %v338 = vrot.slane %v72, %v337
    %v339 = vlaneseq
    %v340 = vshrl.u32 %v339, 7
    %v341 = vsub.s32 6, %v340
    %v342 = vrot.slane %v72, %v341
    %v343 = vlaneseq
    %v344 = vshrl.u32 %v343, 7
    %v345 = vsub.s32 7, %v344
    %v346 = vrot.slane %v72, %v345
    %v347 = vlaneseq
    %v348 = vshrl.u32 %v347, 7
    %v349 = vsub.s32 0, %v348
    %v350 = vrot.slane %v73, %v349
    %v351 = vlaneseq
    %v352 = vshrl.u32 %v351, 7
    %v353 = vsub.s32 1, %v352
    %v354 = vrot.slane %v73, %v353
    %v355 = vlaneseq
    %v356 = vshrl.u32 %v355, 7
    %v357 = vsub.s32 2, %v356
    %v358 = vrot.slane %v73, %v357
    %v359 = vlaneseq
    %v360 = vshrl.u32 %v359, 7
    %v361 = vsub.s32 3, %v360
    %v362 = vrot.slane %v73, %v361
    %v363 = vlaneseq
    %v364 = vshrl.u32 %v363, 7
    %v365 = vsub.s32 4, %v364
    %v366 = vrot.slane %v73, %v365
    %v367 = vlaneseq
    %v368 = vshrl.u32 %v367, 7
    %v369 = vsub.s32 5, %v368
    %v370 = vrot.slane %v73, %v369
    %v371 = vlaneseq
    %v372 = vshrl.u32 %v371, 7
    %v373 = vsub.s32 6, %v372
    %v374 = vrot.slane %v73, %v373
    %v375 = vlaneseq
    %v376 = vshrl.u32 %v375, 7
    %v377 = vsub.s32 7, %v376
    %v378 = vrot.slane %v73, %v377
    %v379 = vlaneseq
    %v380 = vshrl.u32 %v379, 7
    %v381 = vsub.s32 0, %v380
    %v382 = vrot.slane %v74, %v381
    %v383 = vlaneseq
    %v384 = vshrl.u32 %v383, 7
    %v385 = vsub.s32 1, %v384
    %v386 = vrot.slane %v74, %v385
    %v387 = vlaneseq
    %v388 = vshrl.u32 %v387, 7
    %v389 = vsub.s32 2, %v388
    %v390 = vrot.slane %v74, %v389
    %v391 = vlaneseq
    %v392 = vshrl.u32 %v391, 7
    %v393 = vsub.s32 3, %v392
    %v394 = vrot.slane %v74, %v393
    %v395 = vlaneseq
    %v396 = vshrl.u32 %v395, 7
    %v397 = vsub.s32 4, %v396
    %v398 = vrot.slane %v74, %v397
    %v399 = vlaneseq
    %v400 = vshrl.u32 %v399, 7
    %v401 = vsub.s32 5, %v400
    %v402 = vrot.slane %v74, %v401
    %v403 = vlaneseq
    %v404 = vshrl.u32 %v403, 7
    %v405 = vsub.s32 6, %v404
    %v406 = vrot.slane %v74, %v405
    %v407 = vlaneseq
    %v408 = vshrl.u32 %v407, 7
    %v409 = vsub.s32 7, %v408
    %v410 = vrot.slane %v74, %v409
    %v411 = vlaneseq
    %v412 = vshrl.u32 %v411, 7
    %v413 = vsub.s32 0, %v412
    %v414 = vrot.slane %v75, %v413
    %v415 = vlaneseq
    %v416 = vshrl.u32 %v415, 7
    %v417 = vsub.s32 1, %v416
    %v418 = vrot.slane %v75, %v417
    %v419 = vlaneseq
    %v420 = vshrl.u32 %v419, 7
    %v421 = vsub.s32 2, %v420
    %v422 = vrot.slane %v75, %v421
    %v423 = vlaneseq
    %v424 = vshrl.u32 %v423, 7
    %v425 = vsub.s32 3, %v424
    %v426 = vrot.slane %v75, %v425
    %v427 = vlaneseq
    %v428 = vshrl.u32 %v427, 7
    %v429 = vsub.s32 4, %v428
    %v430 = vrot.slane %v75, %v429
    %v431 = vlaneseq
    %v432 = vshrl.u32 %v431, 7
    %v433 = vsub.s32 5, %v432
    %v434 = vrot.slane %v75, %v433
    %v435 = vlaneseq
    %v436 = vshrl.u32 %v435, 7
    %v437 = vsub.s32 6, %v436
    %v438 = vrot.slane %v75, %v437
    %v439 = vlaneseq
    %v440 = vshrl.u32 %v439, 7
    %v441 = vsub.s32 7, %v440
    %v442 = vrot.slane %v75, %v441
    %v443 = vlaneseq
    %v444 = vshrl.u32 %v443, 7
    %v445 = vsub.s32 0, %v444
    %v446 = vrot.slane %v76, %v445
    %v447 = vlaneseq
    %v448 = vshrl.u32 %v447, 7
    %v449 = vsub.s32 1, %v448
    %v450 = vrot.slane %v76, %v449
    %v451 = vlaneseq
    %v452 = vshrl.u32 %v451, 7
    %v453 = vsub.s32 2, %v452
    %v454 = vrot.slane %v76, %v453
    %v455 = vlaneseq
    %v456 = vshrl.u32 %v455, 7
    %v457 = vsub.s32 3, %v456
    %v458 = vrot.slane %v76, %v457
    %v459 = vlaneseq
    %v460 = vshrl.u32 %v459, 7
    %v461 = vsub.s32 4, %v460
    %v462 = vrot.slane %v76, %v461
    %v463 = vlaneseq
    %v464 = vshrl.u32 %v463, 7
    %v465 = vsub.s32 5, %v464
    %v466 = vrot.slane %v76, %v465
    %v467 = vlaneseq
    %v468 = vshrl.u32 %v467, 7
    %v469 = vsub.s32 6, %v468
    %v470 = vrot.slane %v76, %v469
    %v471 = vlaneseq
    %v472 = vshrl.u32 %v471, 7
    %v473 = vsub.s32 7, %v472
    %v474 = vrot.slane %v76, %v473
    %v475 = vlaneseq
    %v476 = vshrl.u32 %v475, 7
    %v477 = vsub.s32 0, %v476
    %v478 = vrot.slane %v77, %v477
    %v479 = vlaneseq
    %v480 = vshrl.u32 %v479, 7
    %v481 = vsub.s32 1, %v480
    %v482 = vrot.slane %v77, %v481
    %v483 = vlaneseq
    %v484 = vshrl.u32 %v483, 7
    %v485 = vsub.s32 2, %v484
    %v486 = vrot.slane %v77, %v485
    %v487 = vlaneseq
    %v488 = vshrl.u32 %v487, 7
    %v489 = vsub.s32 3, %v488
    %v490 = vrot.slane %v77, %v489
    %v491 = vlaneseq
    %v492 = vshrl.u32 %v491, 7
    %v493 = vsub.s32 4, %v492
    %v494 = vrot.slane %v77, %v493
    %v495 = vlaneseq
    %v496 = vshrl.u32 %v495, 7
    %v497 = vsub.s32 5, %v496
    %v498 = vrot.slane %v77, %v497
    %v499 = vcombine.low %v94, %v98
    %v500 = vcombine.low %v102, %v106
    %v502 = vunpack.c.l.s4 1983009808
    %v503 = vunpack.c.0.s8 %v502
    %v504 = vlaneseq
    %v505 = vshrl.u32 %v504, 7
    %v506 = vsub.s32 %v503, %v505
    %v507 = vrot.slane %v499, %v506
    %v509 = vunpack.c.l.s4 1983009808
    %v510 = vunpack.c.0.s8 %v509
    %v511 = vlaneseq
    %v512 = vshrl.u32 %v511, 7
    %v513 = vsub.s32 %v510, %v512
    %v514 = vrot.slane %v500, %v513
    %v515 = vcombine.low %v507, %v514
    %v516 = vcombine.low %v110, %v114
    %v517 = vcombine.low %v118, %v122
    %v519 = vunpack.c.l.s4 1983009808
    %v520 = vunpack.c.0.s8 %v519
    %v521 = vlaneseq
    %v522 = vshrl.u32 %v521, 7
    %v523 = vsub.s32 %v520, %v522
    %v524 = vrot.slane %v516, %v523
    %v526 = vunpack.c.l.s4 1983009808
    %v527 = vunpack.c.0.s8 %v526
    %v528 = vlaneseq
    %v529 = vshrl.u32 %v528, 7
    %v530 = vsub.s32 %v527, %v529
    %v531 = vrot.slane %v517, %v530
    %v532 = vcombine.low %v524, %v531
    %v533 = vcombine.low %v126, %v130
    %v534 = vcombine.low %v134, %v138
    %v536 = vunpack.c.l.s4 1983009808
    %v537 = vunpack.c.0.s8 %v536
    %v538 = vlaneseq
    %v539 = vshrl.u32 %v538, 7
    %v540 = vsub.s32 %v537, %v539
    %v541 = vrot.slane %v533, %v540
    %v543 = vunpack.c.l.s4 1983009808
    %v544 = vunpack.c.0.s8 %v543
    %v545 = vlaneseq
    %v546 = vshrl.u32 %v545, 7
    %v547 = vsub.s32 %v544, %v546
    %v548 = vrot.slane %v534, %v547
    %v549 = vcombine.low %v541, %v548
    %v550 = vcombine.low %v142, %v146
    %v551 = vcombine.low %v150, %v154
    %v553 = vunpack.c.l.s4 1983009808
    %v554 = vunpack.c.0.s8 %v553
    %v555 = vlaneseq
    %v556 = vshrl.u32 %v555, 7
    %v557 = vsub.s32 %v554, %v556
    %v558 = vrot.slane %v550, %v557
    %v560 = vunpack.c.l.s4 1983009808
    %v561 = vunpack.c.0.s8 %v560
    %v562 = vlaneseq
    %v563 = vshrl.u32 %v562, 7
    %v564 = vsub.s32 %v561, %v563
    %v565 = vrot.slane %v551, %v564
    %v566 = vcombine.low %v558, %v565
    %v567 = vcombine.low %v158, %v162
    %v568 = vcombine.low %v166, %v170
    %v570 = vunpack.c.l.s4 1983009808
    %v571 = vunpack.c.0.s8 %v570
    %v572 = vlaneseq
    %v573 = vshrl.u32 %v572, 7
    %v574 = vsub.s32 %v571, %v573
    %v575 = vrot.slane %v567, %v574
    %v577 = vunpack.c.l.s4 1983009808
    %v578 = vunpack.c.0.s8 %v577
    %v579 = vlaneseq
    %v580 = vshrl.u32 %v579, 7
    %v581 = vsub.s32 %v578, %v580
    %v582 = vrot.slane %v568, %v581
    %v583 = vcombine.low %v575, %v582
    %v584 = vcombine.low %v174, %v178
    %v585 = vcombine.low %v182, %v186
    %v587 = vunpack.c.l.s4 1983009808
    %v588 = vunpack.c.0.s8 %v587
    %v589 = vlaneseq
    %v590 = vshrl.u32 %v589, 7
    %v591 = vsub.s32 %v588, %v590
    %v592 = vrot.slane %v584, %v591
    %v594 = vunpack.c.l.s4 1983009808
    %v595 = vunpack.c.0.s8 %v594
    %v596 = vlaneseq
    %v597 = vshrl.u32 %v596, 7
    %v598 = vsub.s32 %v595, %v597
    %v599 = vrot.slane %v585, %v598
    %v600 = vcombine.low %v592, %v599
    %v601 = vcombine.low %v190, %v194
    %v602 = vcombine.low %v198, %v202
    %v604 = vunpack.c.l.s4 1983009808
    %v605 = vunpack.c.0.s8 %v604
    %v606 = vlaneseq
    %v607 = vshrl.u32 %v606, 7
    %v608 = vsub.s32 %v605, %v607
    %v609 = vrot.slane %v601, %v608
    %v611 = vunpack.c.l.s4 1983009808
    %v612 = vunpack.c.0.s8 %v611
    %v613 = vlaneseq
    %v614 = vshrl.u32 %v613, 7
    %v615 = vsub.s32 %v612, %v614
    %v616 = vrot.slane %v602, %v615
    %v617 = vcombine.low %v609, %v616
    %v618 = vcombine.low %v206, %v210
    %v619 = vcombine.low %v214, %v218
    %v621 = vunpack.c.l.s4 1983009808
    %v622 = vunpack.c.0.s8 %v621
    %v623 = vlaneseq
    %v624 = vshrl.u32 %v623, 7
    %v625 = vsub.s32 %v622, %v624
    %v626 = vrot.slane %v618, %v625
    %v628 = vunpack.c.l.s4 1983009808
    %v629 = vunpack.c.0.s8 %v628
    %v630 = vlaneseq
    %v631 = vshrl.u32 %v630, 7
    %v632 = vsub.s32 %v629, %v631
    %v633 = vrot.slane %v619, %v632
    %v634 = vcombine.low %v626, %v633
    %v635 = vcombine.low %v222, %v226
    %v636 = vcombine.low %v230, %v234
    %v638 = vunpack.c.l.s4 1983009808
    %v639 = vunpack.c.0.s8 %v638
    %v640 = vlaneseq
    %v641 = vshrl.u32 %v640, 7
    %v642 = vsub.s32 %v639, %v641
    %v643 = vrot.slane %v635, %v642
    %v645 = vunpack.c.l.s4 1983009808
    %v646 = vunpack.c.0.s8 %v645
    %v647 = vlaneseq
    %v648 = vshrl.u32 %v647, 7
    %v649 = vsub.s32 %v646, %v648
    %v650 = vrot.slane %v636, %v649
    %v651 = vcombine.low %v643, %v650
    %v652 = vcombine.low %v238, %v242
    %v653 = vcombine.low %v246, %v250
    %v655 = vunpack.c.l.s4 1983009808
    %v656 = vunpack.c.0.s8 %v655
    %v657 = vlaneseq
    %v658 = vshrl.u32 %v657, 7
    %v659 = vsub.s32 %v656, %v658
    %v660 = vrot.slane %v652, %v659
    %v662 = vunpack.c.l.s4 1983009808
    %v663 = vunpack.c.0.s8 %v662
    %v664 = vlaneseq
    %v665 = vshrl.u32 %v664, 7
    %v666 = vsub.s32 %v663, %v665
    %v667 = vrot.slane %v653, %v666
    %v668 = vcombine.low %v660, %v667
    %v669 = vcombine.low %v254, %v258
    %v670 = vcombine.low %v262, %v266
    %v672 = vunpack.c.l.s4 1983009808
    %v673 = vunpack.c.0.s8 %v672
    %v674 = vlaneseq
    %v675 = vshrl.u32 %v674, 7
    %v676 = vsub.s32 %v673, %v675
    %v677 = vrot.slane %v669, %v676
    %v679 = vunpack.c.l.s4 1983009808
    %v680 = vunpack.c.0.s8 %v679
    %v681 = vlaneseq
    %v682 = vshrl.u32 %v681, 7
    %v683 = vsub.s32 %v680, %v682
    %v684 = vrot.slane %v670, %v683
    %v685 = vcombine.low %v677, %v684
    %v686 = vcombine.low %v270, %v274
    %v687 = vcombine.low %v278, %v282
    %v689 = vunpack.c.l.s4 1983009808
    %v690 = vunpack.c.0.s8 %v689
    %v691 = vlaneseq
    %v692 = vshrl.u32 %v691, 7
    %v693 = vsub.s32 %v690, %v692
    %v694 = vrot.slane %v686, %v693
    %v696 = vunpack.c.l.s4 1983009808
    %v697 = vunpack.c.0.s8 %v696
    %v698 = vlaneseq
    %v699 = vshrl.u32 %v698, 7
    %v700 = vsub.s32 %v697, %v699
    %v701 = vrot.slane %v687, %v700
    %v702 = vcombine.low %v694, %v701
    %v703 = vcombine.low %v286, %v290
    %v704 = vcombine.low %v294, %v298
    %v706 = vunpack.c.l.s4 1983009808
    %v707 = vunpack.c.0.s8 %v706
    %v708 = vlaneseq
    %v709 = vshrl.u32 %v708, 7
    %v710 = vsub.s32 %v707, %v709
    %v711 = vrot.slane %v703, %v710
    %v713 = vunpack.c.l.s4 1983009808
    %v714 = vunpack.c.0.s8 %v713
    %v715 = vlaneseq
    %v716 = vshrl.u32 %v715, 7
    %v717 = vsub.s32 %v714, %v716
    %v718 = vrot.slane %v704, %v717
    %v719 = vcombine.low %v711, %v718
    %v720 = vcombine.low %v302, %v306
    %v721 = vcombine.low %v310, %v314
    %v723 = vunpack.c.l.s4 1983009808
    %v724 = vunpack.c.0.s8 %v723
    %v725 = vlaneseq
    %v726 = vshrl.u32 %v725, 7
    %v727 = vsub.s32 %v724, %v726
    %v728 = vrot.slane %v720, %v727
    %v730 = vunpack.c.l.s4 1983009808
    %v731 = vunpack.c.0.s8 %v730
    %v732 = vlaneseq
    %v733 = vshrl.u32 %v732, 7
    %v734 = vsub.s32 %v731, %v733
    %v735 = vrot.slane %v721, %v734
    %v736 = vcombine.low %v728, %v735
    %v737 = vcombine.low %v318, %v322
    %v738 = vcombine.low %v326, %v330
    %v740 = vunpack.c.l.s4 1983009808
    %v741 = vunpack.c.0.s8 %v740
    %v742 = vlaneseq
    %v743 = vshrl.u32 %v742, 7
    %v744 = vsub.s32 %v741, %v743
    %v745 = vrot.slane %v737, %v744
    %v747 = vunpack.c.l.s4 1983009808
    %v748 = vunpack.c.0.s8 %v747
    %v749 = vlaneseq
    %v750 = vshrl.u32 %v749, 7
    %v751 = vsub.s32 %v748, %v750
    %v752 = vrot.slane %v738, %v751
    %v753 = vcombine.low %v745, %v752
    %v754 = vcombine.low %v334, %v338
    %v755 = vcombine.low %v342, %v346
    %v757 = vunpack.c.l.s4 1983009808
    %v758 = vunpack.c.0.s8 %v757
    %v759 = vlaneseq
    %v760 = vshrl.u32 %v759, 7
    %v761 = vsub.s32 %v758, %v760
    %v762 = vrot.slane %v754, %v761
    %v764 = vunpack.c.l.s4 1983009808
    %v765 = vunpack.c.0.s8 %v764
    %v766 = vlaneseq
    %v767 = vshrl.u32 %v766, 7
    %v768 = vsub.s32 %v765, %v767
    %v769 = vrot.slane %v755, %v768
    %v770 = vcombine.low %v762, %v769
    %v771 = vcombine.low %v350, %v354
    %v772 = vcombine.low %v358, %v362
    %v774 = vunpack.c.l.s4 1983009808
    %v775 = vunpack.c.0.s8 %v774
    %v776 = vlaneseq
    %v777 = vshrl.u32 %v776, 7
    %v778 = vsub.s32 %v775, %v777
    %v779 = vrot.slane %v771, %v778
    %v781 = vunpack.c.l.s4 1983009808
    %v782 = vunpack.c.0.s8 %v781
    %v783 = vlaneseq
    %v784 = vshrl.u32 %v783, 7
    %v785 = vsub.s32 %v782, %v784
    %v786 = vrot.slane %v772, %v785
    %v787 = vcombine.low %v779, %v786
    %v788 = vcombine.low %v366, %v370
    %v789 = vcombine.low %v374, %v378
    %v791 = vunpack.c.l.s4 1983009808
    %v792 = vunpack.c.0.s8 %v791
    %v793 = vlaneseq
    %v794 = vshrl.u32 %v793, 7
    %v795 = vsub.s32 %v792, %v794
    %v796 = vrot.slane %v788, %v795
    %v798 = vunpack.c.l.s4 1983009808
    %v799 = vunpack.c.0.s8 %v798
    %v800 = vlaneseq
    %v801 = vshrl.u32 %v800, 7
    %v802 = vsub.s32 %v799, %v801
    %v803 = vrot.slane %v789, %v802
    %v804 = vcombine.low %v796, %v803
    %v805 = vcombine.low %v382, %v386
    %v806 = vcombine.low %v390, %v394
    %v808 = vunpack.c.l.s4 1983009808
    %v809 = vunpack.c.0.s8 %v808
    %v810 = vlaneseq
    %v811 = vshrl.u32 %v810, 7
    %v812 = vsub.s32 %v809, %v811
    %v813 = vrot.slane %v805, %v812
    %v815 = vunpack.c.l.s4 1983009808
    %v816 = vunpack.c.0.s8 %v815
    %v817 = vlaneseq
    %v818 = vshrl.u32 %v817, 7
    %v819 = vsub.s32 %v816, %v818
    %v820 = vrot.slane %v806, %v819
    %v821 = vcombine.low %v813, %v820
    %v822 = vcombine.low %v398, %v402
    %v823 = vcombine.low %v406, %v410
    %v825 = vunpack.c.l.s4 1983009808
    %v826 = vunpack.c.0.s8 %v825
    %v827 = vlaneseq
    %v828 = vshrl.u32 %v827, 7
    %v829 = vsub.s32 %v826, %v828
    %v830 = vrot.slane %v822, %v829
    %v832 = vunpack.c.l.s4 1983009808
    %v833 = vunpack.c.0.s8 %v832
    %v834 = vlaneseq
    %v835 = vshrl.u32 %v834, 7
    %v836 = vsub.s32 %v833, %v835
    %v837 = vrot.slane %v823, %v836
    %v838 = vcombine.low %v830, %v837
    %v839 = vcombine.low %v414, %v418
    %v840 = vcombine.low %v422, %v426
    %v842 = vunpack.c.l.s4 1983009808
    %v843 = vunpack.c.0.s8 %v842
    %v844 = vlaneseq
    %v845 = vshrl.u32 %v844, 7
    %v846 = vsub.s32 %v843, %v845
    %v847 = vrot.slane %v839, %v846
    %v849 = vunpack.c.l.s4 1983009808
    %v850 = vunpack.c.0.s8 %v849
    %v851 = vlaneseq
    %v852 = vshrl.u32 %v851, 7
    %v853 = vsub.s32 %v850, %v852
    %v854 = vrot.slane %v840, %v853
    %v855 = vcombine.low %v847, %v854
    %v856 = vcombine.low %v430, %v434
    %v857 = vcombine.low %v438, %v442
    %v859 = vunpack.c.l.s4 1983009808
    %v860 = vunpack.c.0.s8 %v859
    %v861 = vlaneseq
    %v862 = vshrl.u32 %v861, 7
    %v863 = vsub.s32 %v860, %v862
    %v864 = vrot.slane %v856, %v863
    %v866 = vunpack.c.l.s4 1983009808
    %v867 = vunpack.c.0.s8 %v866
    %v868 = vlaneseq
    %v869 = vshrl.u32 %v868, 7
    %v870 = vsub.s32 %v867, %v869
    %v871 = vrot.slane %v857, %v870
    %v872 = vcombine.low %v864, %v871
    %v873 = vcombine.low %v446, %v450
    %v874 = vcombine.low %v454, %v458
    %v876 = vunpack.c.l.s4 1983009808
    %v877 = vunpack.c.0.s8 %v876
    %v878 = vlaneseq
    %v879 = vshrl.u32 %v878, 7
    %v880 = vsub.s32 %v877, %v879
    %v881 = vrot.slane %v873, %v880
    %v883 = vunpack.c.l.s4 1983009808
    %v884 = vunpack.c.0.s8 %v883
    %v885 = vlaneseq
    %v886 = vshrl.u32 %v885, 7
    %v887 = vsub.s32 %v884, %v886
    %v888 = vrot.slane %v874, %v887
    %v889 = vcombine.low %v881, %v888
    %v890 = vcombine.low %v462, %v466
    %v891 = vcombine.low %v470, %v474
    %v893 = vunpack.c.l.s4 1983009808
    %v894 = vunpack.c.0.s8 %v893
    %v895 = vlaneseq
    %v896 = vshrl.u32 %v895, 7
    %v897 = vsub.s32 %v894, %v896
    %v898 = vrot.slane %v890, %v897
    %v900 = vunpack.c.l.s4 1983009808
    %v901 = vunpack.c.0.s8 %v900
    %v902 = vlaneseq
    %v903 = vshrl.u32 %v902, 7
    %v904 = vsub.s32 %v901, %v903
    %v905 = vrot.slane %v891, %v904
    %v906 = vcombine.low %v898, %v905
    %v907 = vcombine.low %v478, %v482
    %v908 = vcombine.low %v486, %v490
    %v910 = vunpack.c.l.s4 1983009808
    %v911 = vunpack.c.0.s8 %v910
    %v912 = vlaneseq
    %v913 = vshrl.u32 %v912, 7
    %v914 = vsub.s32 %v911, %v913
    %v915 = vrot.slane %v907, %v914
    %v917 = vunpack.c.l.s4 1983009808
    %v918 = vunpack.c.0.s8 %v917
    %v919 = vlaneseq
    %v920 = vshrl.u32 %v919, 7
    %v921 = vsub.s32 %v918, %v920
    %v922 = vrot.slane %v908, %v921
    %v923 = vcombine.low %v915, %v922
    %v924 = vcombine.low %v494, %v498
    %v926 = vunpack.c.l.s4 1983009808
    %v927 = vunpack.c.0.s8 %v926
    %v928 = vlaneseq
    %v929 = vshrl.u32 %v928, 7
    %v930 = vsub.s32 %v927, %v929
    %v931 = vrot.slane %v924, %v930
    %v958 = vmul.f32 %v39, %v515
    %v959 = vmul.f32 %v40, %v532
    %v960 = vmul.f32 %v41, %v549
    %v961 = vmul.f32 %v42, %v566
    %v962 = vmul.f32 %v43, %v583
    %v963 = vmul.f32 %v44, %v600
    %v964 = vmul.f32 %v45, %v617
    %v965 = vmul.f32 %v46, %v634
    %v966 = vmul.f32 %v47, %v651
    %v967 = vmul.f32 %v48, %v668
    %v968 = vmul.f32 %v49, %v685
    %v969 = vmul.f32 %v50, %v702
    %v970 = vmul.f32 %v51, %v719
    %v971 = vmul.f32 %v52, %v736
    %v972 = vmul.f32 %v53, %v753
    %v973 = vmul.f32 %v54, %v770
    %v974 = vmul.f32 %v55, %v787
    %v975 = vmul.f32 %v56, %v804
    %v976 = vmul.f32 %v57, %v821
    %v977 = vmul.f32 %v58, %v838
    %v978 = vmul.f32 %v59, %v855
    %v979 = vmul.f32 %v60, %v872
    %v980 = vmul.f32 %v61, %v889
    %v981 = vmul.f32 %v62, %v906
    %v982 = vmul.f32 %v63, %v923
    %v983 = vmul.f32 %v64, %v931
    %v1010 = vcombine.high %v958, %v958
    %v1012 = vunpack.c.l.s4 1983009808
    %v1013 = vunpack.c.0.s8 %v1012
    %v1014 = vlaneseq
    %v1015 = vshrl.u32 %v1014, 7
    %v1016 = vsub.s32 %v1013, %v1015
    %v1017 = vrot.slane %v958, %v1016
    %v1019 = vunpack.c.l.s4 1983009808
    %v1020 = vunpack.c.0.s8 %v1019
    %v1021 = vlaneseq
    %v1022 = vshrl.u32 %v1021, 7
    %v1023 = vsub.s32 %v1020, %v1022
    %v1024 = vrot.slane %v1010, %v1023
    %v1025 = vcombine.high %v1017, %v1017
    %v1026 = vcombine.high %v1024, %v1024
    %v1027 = vcombine.high %v959, %v959
    %v1029 = vunpack.c.l.s4 1983009808
    %v1030 = vunpack.c.0.s8 %v1029
    %v1031 = vlaneseq
    %v1032 = vshrl.u32 %v1031, 7
    %v1033 = vsub.s32 %v1030, %v1032
    %v1034 = vrot.slane %v959, %v1033
    %v1036 = vunpack.c.l.s4 1983009808
    %v1037 = vunpack.c.0.s8 %v1036
    %v1038 = vlaneseq
    %v1039 = vshrl.u32 %v1038, 7
    %v1040 = vsub.s32 %v1037, %v1039
    %v1041 = vrot.slane %v1027, %v1040
    %v1042 = vcombine.high %v1034, %v1034
    %v1043 = vcombine.high %v1041, %v1041
    %v1044 = vcombine.high %v960, %v960
    %v1046 = vunpack.c.l.s4 1983009808
    %v1047 = vunpack.c.0.s8 %v1046
    %v1048 = vlaneseq
    %v1049 = vshrl.u32 %v1048, 7
    %v1050 = vsub.s32 %v1047, %v1049
    %v1051 = vrot.slane %v960, %v1050
    %v1053 = vunpack.c.l.s4 1983009808
    %v1054 = vunpack.c.0.s8 %v1053
    %v1055 = vlaneseq
    %v1056 = vshrl.u32 %v1055, 7
    %v1057 = vsub.s32 %v1054, %v1056
    %v1058 = vrot.slane %v1044, %v1057
    %v1059 = vcombine.high %v1051, %v1051
    %v1060 = vcombine.high %v1058, %v1058
    %v1061 = vcombine.high %v961, %v961
    %v1063 = vunpack.c.l.s4 1983009808
    %v1064 = vunpack.c.0.s8 %v1063
    %v1065 = vlaneseq
    %v1066 = vshrl.u32 %v1065, 7
    %v1067 = vsub.s32 %v1064, %v1066
    %v1068 = vrot.slane %v961, %v1067
    %v1070 = vunpack.c.l.s4 1983009808
    %v1071 = vunpack.c.0.s8 %v1070
    %v1072 = vlaneseq
    %v1073 = vshrl.u32 %v1072, 7
    %v1074 = vsub.s32 %v1071, %v1073
    %v1075 = vrot.slane %v1061, %v1074
    %v1076 = vcombine.high %v1068, %v1068
    %v1077 = vcombine.high %v1075, %v1075
    %v1078 = vcombine.high %v962, %v962
    %v1080 = vunpack.c.l.s4 1983009808
    %v1081 = vunpack.c.0.s8 %v1080
    %v1082 = vlaneseq
    %v1083 = vshrl.u32 %v1082, 7
    %v1084 = vsub.s32 %v1081, %v1083
    %v1085 = vrot.slane %v962, %v1084
    %v1087 = vunpack.c.l.s4 1983009808
    %v1088 = vunpack.c.0.s8 %v1087
    %v1089 = vlaneseq
    %v1090 = vshrl.u32 %v1089, 7
    %v1091 = vsub.s32 %v1088, %v1090
    %v1092 = vrot.slane %v1078, %v1091
    %v1093 = vcombine.high %v1085, %v1085
    %v1094 = vcombine.high %v1092, %v1092
    %v1095 = vcombine.high %v963, %v963
    %v1097 = vunpack.c.l.s4 1983009808
    %v1098 = vunpack.c.0.s8 %v1097
    %v1099 = vlaneseq
    %v1100 = vshrl.u32 %v1099, 7
    %v1101 = vsub.s32 %v1098, %v1100
    %v1102 = vrot.slane %v963, %v1101
    %v1104 = vunpack.c.l.s4 1983009808
    %v1105 = vunpack.c.0.s8 %v1104
    %v1106 = vlaneseq
    %v1107 = vshrl.u32 %v1106, 7
    %v1108 = vsub.s32 %v1105, %v1107
    %v1109 = vrot.slane %v1095, %v1108
    %v1110 = vcombine.high %v1102, %v1102
    %v1111 = vcombine.high %v1109, %v1109
    %v1112 = vcombine.high %v964, %v964
    %v1114 = vunpack.c.l.s4 1983009808
    %v1115 = vunpack.c.0.s8 %v1114
    %v1116 = vlaneseq
    %v1117 = vshrl.u32 %v1116, 7
    %v1118 = vsub.s32 %v1115, %v1117
    %v1119 = vrot.slane %v964, %v1118
    %v1121 = vunpack.c.l.s4 1983009808
    %v1122 = vunpack.c.0.s8 %v1121
    %v1123 = vlaneseq
    %v1124 = vshrl.u32 %v1123, 7
    %v1125 = vsub.s32 %v1122, %v1124
    %v1126 = vrot.slane %v1112, %v1125
    %v1127 = vcombine.high %v1119, %v1119
    %v1128 = vcombine.high %v1126, %v1126
    %v1129 = vcombine.high %v965, %v965
    %v1131 = vunpack.c.l.s4 1983009808
    %v1132 = vunpack.c.0.s8 %v1131
    %v1133 = vlaneseq
    %v1134 = vshrl.u32 %v1133, 7
    %v1135 = vsub.s32 %v1132, %v1134
    %v1136 = vrot.slane %v965, %v1135
    %v1138 = vunpack.c.l.s4 1983009808
    %v1139 = vunpack.c.0.s8 %v1138
    %v1140 = vlaneseq
    %v1141 = vshrl.u32 %v1140, 7
    %v1142 = vsub.s32 %v1139, %v1141
    %v1143 = vrot.slane %v1129, %v1142
    %v1144 = vcombine.high %v1136, %v1136
    %v1145 = vcombine.high %v1143, %v1143
    %v1146 = vcombine.high %v966, %v966
    %v1148 = vunpack.c.l.s4 1983009808
    %v1149 = vunpack.c.0.s8 %v1148
    %v1150 = vlaneseq
    %v1151 = vshrl.u32 %v1150, 7
    %v1152 = vsub.s32 %v1149, %v1151
    %v1153 = vrot.slane %v966, %v1152
    %v1155 = vunpack.c.l.s4 1983009808
    %v1156 = vunpack.c.0.s8 %v1155
    %v1157 = vlaneseq
    %v1158 = vshrl.u32 %v1157, 7
    %v1159 = vsub.s32 %v1156, %v1158
    %v1160 = vrot.slane %v1146, %v1159
    %v1161 = vcombine.high %v1153, %v1153
    %v1162 = vcombine.high %v1160, %v1160
    %v1163 = vcombine.high %v967, %v967
    %v1165 = vunpack.c.l.s4 1983009808
    %v1166 = vunpack.c.0.s8 %v1165
    %v1167 = vlaneseq
    %v1168 = vshrl.u32 %v1167, 7
    %v1169 = vsub.s32 %v1166, %v1168
    %v1170 = vrot.slane %v967, %v1169
    %v1172 = vunpack.c.l.s4 1983009808
    %v1173 = vunpack.c.0.s8 %v1172
    %v1174 = vlaneseq
    %v1175 = vshrl.u32 %v1174, 7
    %v1176 = vsub.s32 %v1173, %v1175
    %v1177 = vrot.slane %v1163, %v1176
    %v1178 = vcombine.high %v1170, %v1170
    %v1179 = vcombine.high %v1177, %v1177
    %v1180 = vcombine.high %v968, %v968
    %v1182 = vunpack.c.l.s4 1983009808
    %v1183 = vunpack.c.0.s8 %v1182
    %v1184 = vlaneseq
    %v1185 = vshrl.u32 %v1184, 7
    %v1186 = vsub.s32 %v1183, %v1185
    %v1187 = vrot.slane %v968, %v1186
    %v1189 = vunpack.c.l.s4 1983009808
    %v1190 = vunpack.c.0.s8 %v1189
    %v1191 = vlaneseq
    %v1192 = vshrl.u32 %v1191, 7
    %v1193 = vsub.s32 %v1190, %v1192
    %v1194 = vrot.slane %v1180, %v1193
    %v1195 = vcombine.high %v1187, %v1187
    %v1196 = vcombine.high %v1194, %v1194
    %v1197 = vcombine.high %v969, %v969
    %v1199 = vunpack.c.l.s4 1983009808
    %v1200 = vunpack.c.0.s8 %v1199
    %v1201 = vlaneseq
    %v1202 = vshrl.u32 %v1201, 7
    %v1203 = vsub.s32 %v1200, %v1202
    %v1204 = vrot.slane %v969, %v1203
    %v1206 = vunpack.c.l.s4 1983009808
    %v1207 = vunpack.c.0.s8 %v1206
    %v1208 = vlaneseq
    %v1209 = vshrl.u32 %v1208, 7
    %v1210 = vsub.s32 %v1207, %v1209
    %v1211 = vrot.slane %v1197, %v1210
    %v1212 = vcombine.high %v1204, %v1204
    %v1213 = vcombine.high %v1211, %v1211
    %v1214 = vcombine.high %v970, %v970
    %v1216 = vunpack.c.l.s4 1983009808
    %v1217 = vunpack.c.0.s8 %v1216
    %v1218 = vlaneseq
    %v1219 = vshrl.u32 %v1218, 7
    %v1220 = vsub.s32 %v1217, %v1219
    %v1221 = vrot.slane %v970, %v1220
    %v1223 = vunpack.c.l.s4 1983009808
    %v1224 = vunpack.c.0.s8 %v1223
    %v1225 = vlaneseq
    %v1226 = vshrl.u32 %v1225, 7
    %v1227 = vsub.s32 %v1224, %v1226
    %v1228 = vrot.slane %v1214, %v1227
    %v1229 = vcombine.high %v1221, %v1221
    %v1230 = vcombine.high %v1228, %v1228
    %v1231 = vcombine.high %v971, %v971
    %v1233 = vunpack.c.l.s4 1983009808
    %v1234 = vunpack.c.0.s8 %v1233
    %v1235 = vlaneseq
    %v1236 = vshrl.u32 %v1235, 7
    %v1237 = vsub.s32 %v1234, %v1236
    %v1238 = vrot.slane %v971, %v1237
    %v1240 = vunpack.c.l.s4 1983009808
    %v1241 = vunpack.c.0.s8 %v1240
    %v1242 = vlaneseq
    %v1243 = vshrl.u32 %v1242, 7
    %v1244 = vsub.s32 %v1241, %v1243
    %v1245 = vrot.slane %v1231, %v1244
    %v1246 = vcombine.high %v1238, %v1238
    %v1247 = vcombine.high %v1245, %v1245
    %v1248 = vcombine.high %v972, %v972
    %v1250 = vunpack.c.l.s4 1983009808
    %v1251 = vunpack.c.0.s8 %v1250
    %v1252 = vlaneseq
    %v1253 = vshrl.u32 %v1252, 7
    %v1254 = vsub.s32 %v1251, %v1253
    %v1255 = vrot.slane %v972, %v1254
    %v1257 = vunpack.c.l.s4 1983009808
    %v1258 = vunpack.c.0.s8 %v1257
    %v1259 = vlaneseq
    %v1260 = vshrl.u32 %v1259, 7
    %v1261 = vsub.s32 %v1258, %v1260
    %v1262 = vrot.slane %v1248, %v1261
    %v1263 = vcombine.high %v1255, %v1255
    %v1264 = vcombine.high %v1262, %v1262
    %v1265 = vcombine.high %v973, %v973
    %v1267 = vunpack.c.l.s4 1983009808
    %v1268 = vunpack.c.0.s8 %v1267
    %v1269 = vlaneseq
    %v1270 = vshrl.u32 %v1269, 7
    %v1271 = vsub.s32 %v1268, %v1270
    %v1272 = vrot.slane %v973, %v1271
    %v1274 = vunpack.c.l.s4 1983009808
    %v1275 = vunpack.c.0.s8 %v1274
    %v1276 = vlaneseq
    %v1277 = vshrl.u32 %v1276, 7
    %v1278 = vsub.s32 %v1275, %v1277
    %v1279 = vrot.slane %v1265, %v1278
    %v1280 = vcombine.high %v1272, %v1272
    %v1281 = vcombine.high %v1279, %v1279
    %v1282 = vcombine.high %v974, %v974
    %v1284 = vunpack.c.l.s4 1983009808
    %v1285 = vunpack.c.0.s8 %v1284
    %v1286 = vlaneseq
    %v1287 = vshrl.u32 %v1286, 7
    %v1288 = vsub.s32 %v1285, %v1287
    %v1289 = vrot.slane %v974, %v1288
    %v1291 = vunpack.c.l.s4 1983009808
    %v1292 = vunpack.c.0.s8 %v1291
    %v1293 = vlaneseq
    %v1294 = vshrl.u32 %v1293, 7
    %v1295 = vsub.s32 %v1292, %v1294
    %v1296 = vrot.slane %v1282, %v1295
    %v1297 = vcombine.high %v1289, %v1289
    %v1298 = vcombine.high %v1296, %v1296
    %v1299 = vcombine.high %v975, %v975
    %v1301 = vunpack.c.l.s4 1983009808
    %v1302 = vunpack.c.0.s8 %v1301
    %v1303 = vlaneseq
    %v1304 = vshrl.u32 %v1303, 7
    %v1305 = vsub.s32 %v1302, %v1304
    %v1306 = vrot.slane %v975, %v1305
    %v1308 = vunpack.c.l.s4 1983009808
    %v1309 = vunpack.c.0.s8 %v1308
    %v1310 = vlaneseq
    %v1311 = vshrl.u32 %v1310, 7
    %v1312 = vsub.s32 %v1309, %v1311
    %v1313 = vrot.slane %v1299, %v1312
    %v1314 = vcombine.high %v1306, %v1306
    %v1315 = vcombine.high %v1313, %v1313
    %v1316 = vcombine.high %v976, %v976
    %v1318 = vunpack.c.l.s4 1983009808
    %v1319 = vunpack.c.0.s8 %v1318
    %v1320 = vlaneseq
    %v1321 = vshrl.u32 %v1320, 7
    %v1322 = vsub.s32 %v1319, %v1321
    %v1323 = vrot.slane %v976, %v1322
    %v1325 = vunpack.c.l.s4 1983009808
    %v1326 = vunpack.c.0.s8 %v1325
    %v1327 = vlaneseq
    %v1328 = vshrl.u32 %v1327, 7
    %v1329 = vsub.s32 %v1326, %v1328
    %v1330 = vrot.slane %v1316, %v1329
    %v1331 = vcombine.high %v1323, %v1323
    %v1332 = vcombine.high %v1330, %v1330
    %v1333 = vcombine.high %v977, %v977
    %v1335 = vunpack.c.l.s4 1983009808
    %v1336 = vunpack.c.0.s8 %v1335
    %v1337 = vlaneseq
    %v1338 = vshrl.u32 %v1337, 7
    %v1339 = vsub.s32 %v1336, %v1338
    %v1340 = vrot.slane %v977, %v1339
    %v1342 = vunpack.c.l.s4 1983009808
    %v1343 = vunpack.c.0.s8 %v1342
    %v1344 = vlaneseq
    %v1345 = vshrl.u32 %v1344, 7
    %v1346 = vsub.s32 %v1343, %v1345
    %v1347 = vrot.slane %v1333, %v1346
    %v1348 = vcombine.high %v1340, %v1340
    %v1349 = vcombine.high %v1347, %v1347
    %v1350 = vcombine.high %v978, %v978
    %v1352 = vunpack.c.l.s4 1983009808
    %v1353 = vunpack.c.0.s8 %v1352
    %v1354 = vlaneseq
    %v1355 = vshrl.u32 %v1354, 7
    %v1356 = vsub.s32 %v1353, %v1355
    %v1357 = vrot.slane %v978, %v1356
    %v1359 = vunpack.c.l.s4 1983009808
    %v1360 = vunpack.c.0.s8 %v1359
    %v1361 = vlaneseq
    %v1362 = vshrl.u32 %v1361, 7
    %v1363 = vsub.s32 %v1360, %v1362
    %v1364 = vrot.slane %v1350, %v1363
    %v1365 = vcombine.high %v1357, %v1357
    %v1366 = vcombine.high %v1364, %v1364
    %v1367 = vcombine.high %v979, %v979
    %v1369 = vunpack.c.l.s4 1983009808
    %v1370 = vunpack.c.0.s8 %v1369
    %v1371 = vlaneseq
    %v1372 = vshrl.u32 %v1371, 7
    %v1373 = vsub.s32 %v1370, %v1372
    %v1374 = vrot.slane %v979, %v1373
    %v1376 = vunpack.c.l.s4 1983009808
    %v1377 = vunpack.c.0.s8 %v1376
    %v1378 = vlaneseq
    %v1379 = vshrl.u32 %v1378, 7
    %v1380 = vsub.s32 %v1377, %v1379
    %v1381 = vrot.slane %v1367, %v1380
    %v1382 = vcombine.high %v1374, %v1374
    %v1383 = vcombine.high %v1381, %v1381
    %v1384 = vcombine.high %v980, %v980
    %v1386 = vunpack.c.l.s4 1983009808
    %v1387 = vunpack.c.0.s8 %v1386
    %v1388 = vlaneseq
    %v1389 = vshrl.u32 %v1388, 7
    %v1390 = vsub.s32 %v1387, %v1389
    %v1391 = vrot.slane %v980, %v1390
    %v1393 = vunpack.c.l.s4 1983009808
    %v1394 = vunpack.c.0.s8 %v1393
    %v1395 = vlaneseq
    %v1396 = vshrl.u32 %v1395, 7
    %v1397 = vsub.s32 %v1394, %v1396
    %v1398 = vrot.slane %v1384, %v1397
    %v1399 = vcombine.high %v1391, %v1391
    %v1400 = vcombine.high %v1398, %v1398
    %v1401 = vcombine.high %v981, %v981
    %v1403 = vunpack.c.l.s4 1983009808
    %v1404 = vunpack.c.0.s8 %v1403
    %v1405 = vlaneseq
    %v1406 = vshrl.u32 %v1405, 7
    %v1407 = vsub.s32 %v1404, %v1406
    %v1408 = vrot.slane %v981, %v1407
    %v1410 = vunpack.c.l.s4 1983009808
    %v1411 = vunpack.c.0.s8 %v1410
    %v1412 = vlaneseq
    %v1413 = vshrl.u32 %v1412, 7
    %v1414 = vsub.s32 %v1411, %v1413
    %v1415 = vrot.slane %v1401, %v1414
    %v1416 = vcombine.high %v1408, %v1408
    %v1417 = vcombine.high %v1415, %v1415
    %v1418 = vcombine.high %v982, %v982
    %v1420 = vunpack.c.l.s4 1983009808
    %v1421 = vunpack.c.0.s8 %v1420
    %v1422 = vlaneseq
    %v1423 = vshrl.u32 %v1422, 7
    %v1424 = vsub.s32 %v1421, %v1423
    %v1425 = vrot.slane %v982, %v1424
    %v1427 = vunpack.c.l.s4 1983009808
    %v1428 = vunpack.c.0.s8 %v1427
    %v1429 = vlaneseq
    %v1430 = vshrl.u32 %v1429, 7
    %v1431 = vsub.s32 %v1428, %v1430
    %v1432 = vrot.slane %v1418, %v1431
    %v1433 = vcombine.high %v1425, %v1425
    %v1434 = vcombine.high %v1432, %v1432
    %v1436 = vunpack.c.l.s4 1983009808
    %v1437 = vunpack.c.0.s8 %v1436
    %v1438 = vlaneseq
    %v1439 = vshrl.u32 %v1438, 7
    %v1440 = vsub.s32 %v1437, %v1439
    %v1441 = vrot.slane %v983, %v1440
    %v1442 = vcombine.high %v1441, %v1441
    %vm1545 = vcmask 1041408
    %v1546 = vsel %vm1545, %v1017, 0.0
    %v1547 = vsel %vm1545, %v1025, 0.0
    %v1548 = vadd.f32 %v1546, %v1547
    %v1549 = vsel %vm1545, %v1024, 0.0
    %v1550 = vadd.f32 %v1548, %v1549
    %v1551 = vsel %vm1545, %v1026, 0.0
    %v1552 = vadd.f32 %v1550, %v1551
    %v1553 = vsel %vm1545, %v1034, 0.0
    %v1554 = vadd.f32 %v1552, %v1553
    %v1555 = vsel %vm1545, %v1042, 0.0
    %v1556 = vadd.f32 %v1554, %v1555
    %v1557 = vsel %vm1545, %v1041, 0.0
    %v1558 = vadd.f32 %v1556, %v1557
    %v1559 = vsel %vm1545, %v1043, 0.0
    %v1560 = vadd.f32 %v1558, %v1559
    %v1561 = vsel %vm1545, %v1051, 0.0
    %v1562 = vadd.f32 %v1560, %v1561
    %v1563 = vsel %vm1545, %v1059, 0.0
    %v1564 = vadd.f32 %v1562, %v1563
    %v1565 = vsel %vm1545, %v1058, 0.0
    %v1566 = vadd.f32 %v1564, %v1565
    %v1567 = vsel %vm1545, %v1060, 0.0
    %v1568 = vadd.f32 %v1566, %v1567
    %v1569 = vsel %vm1545, %v1068, 0.0
    %v1570 = vadd.f32 %v1568, %v1569
    %v1571 = vsel %vm1545, %v1076, 0.0
    %v1572 = vadd.f32 %v1570, %v1571
    %v1573 = vsel %vm1545, %v1075, 0.0
    %v1574 = vadd.f32 %v1572, %v1573
    %v1575 = vsel %vm1545, %v1077, 0.0
    %v1576 = vadd.f32 %v1574, %v1575
    %v1577 = vsel %vm1545, %v1085, 0.0
    %v1578 = vadd.f32 %v1576, %v1577
    %v1579 = vsel %vm1545, %v1093, 0.0
    %v1580 = vadd.f32 %v1578, %v1579
    %v1581 = vsel %vm1545, %v1092, 0.0
    %v1582 = vadd.f32 %v1580, %v1581
    %v1583 = vsel %vm1545, %v1094, 0.0
    %v1584 = vadd.f32 %v1582, %v1583
    %v1585 = vsel %vm1545, %v1102, 0.0
    %v1586 = vadd.f32 %v1584, %v1585
    %v1587 = vsel %vm1545, %v1110, 0.0
    %v1588 = vadd.f32 %v1586, %v1587
    %v1589 = vsel %vm1545, %v1109, 0.0
    %v1590 = vadd.f32 %v1588, %v1589
    %v1591 = vsel %vm1545, %v1111, 0.0
    %v1592 = vadd.f32 %v1590, %v1591
    %v1593 = vsel %vm1545, %v1119, 0.0
    %v1594 = vadd.f32 %v1592, %v1593
    %v1595 = vsel %vm1545, %v1127, 0.0
    %v1596 = vadd.f32 %v1594, %v1595
    %v1597 = vsel %vm1545, %v1126, 0.0
    %v1598 = vadd.f32 %v1596, %v1597
    %v1599 = vsel %vm1545, %v1128, 0.0
    %v1600 = vadd.f32 %v1598, %v1599
    %v1601 = vsel %vm1545, %v1136, 0.0
    %v1602 = vadd.f32 %v1600, %v1601
    %v1603 = vsel %vm1545, %v1144, 0.0
    %v1604 = vadd.f32 %v1602, %v1603
    %v1605 = vsel %vm1545, %v1143, 0.0
    %v1606 = vadd.f32 %v1604, %v1605
    %v1607 = vsel %vm1545, %v1145, 0.0
    %v1608 = vadd.f32 %v1606, %v1607
    %v1609 = vsel %vm1545, %v1153, 0.0
    %v1610 = vadd.f32 %v1608, %v1609
    %v1611 = vsel %vm1545, %v1161, 0.0
    %v1612 = vadd.f32 %v1610, %v1611
    %v1613 = vsel %vm1545, %v1160, 0.0
    %v1614 = vadd.f32 %v1612, %v1613
    %v1615 = vsel %vm1545, %v1162, 0.0
    %v1616 = vadd.f32 %v1614, %v1615
    %v1617 = vsel %vm1545, %v1170, 0.0
    %v1618 = vadd.f32 %v1616, %v1617
    %v1619 = vsel %vm1545, %v1178, 0.0
    %v1620 = vadd.f32 %v1618, %v1619
    %v1621 = vsel %vm1545, %v1177, 0.0
    %v1622 = vadd.f32 %v1620, %v1621
    %v1623 = vsel %vm1545, %v1179, 0.0
    %v1624 = vadd.f32 %v1622, %v1623
    %v1625 = vsel %vm1545, %v1187, 0.0
    %v1626 = vadd.f32 %v1624, %v1625
    %v1627 = vsel %vm1545, %v1195, 0.0
    %v1628 = vadd.f32 %v1626, %v1627
    %v1629 = vsel %vm1545, %v1194, 0.0
    %v1630 = vadd.f32 %v1628, %v1629
    %v1631 = vsel %vm1545, %v1196, 0.0
    %v1632 = vadd.f32 %v1630, %v1631
    %v1633 = vsel %vm1545, %v1204, 0.0
    %v1634 = vadd.f32 %v1632, %v1633
    %v1635 = vsel %vm1545, %v1212, 0.0
    %v1636 = vadd.f32 %v1634, %v1635
    %v1637 = vsel %vm1545, %v1211, 0.0
    %v1638 = vadd.f32 %v1636, %v1637
    %v1639 = vsel %vm1545, %v1213, 0.0
    %v1640 = vadd.f32 %v1638, %v1639
    %v1641 = vsel %vm1545, %v1221, 0.0
    %v1642 = vadd.f32 %v1640, %v1641
    %v1643 = vsel %vm1545, %v1229, 0.0
    %v1644 = vadd.f32 %v1642, %v1643
    %v1645 = vsel %vm1545, %v1228, 0.0
    %v1646 = vadd.f32 %v1644, %v1645
    %v1647 = vsel %vm1545, %v1230, 0.0
    %v1648 = vadd.f32 %v1646, %v1647
    %v1649 = vsel %vm1545, %v1238, 0.0
    %v1650 = vadd.f32 %v1648, %v1649
    %v1651 = vsel %vm1545, %v1246, 0.0
    %v1652 = vadd.f32 %v1650, %v1651
    %v1653 = vsel %vm1545, %v1245, 0.0
    %v1654 = vadd.f32 %v1652, %v1653
    %v1655 = vsel %vm1545, %v1247, 0.0
    %v1656 = vadd.f32 %v1654, %v1655
    %v1657 = vsel %vm1545, %v1255, 0.0
    %v1658 = vadd.f32 %v1656, %v1657
    %v1659 = vsel %vm1545, %v1263, 0.0
    %v1660 = vadd.f32 %v1658, %v1659
    %v1661 = vsel %vm1545, %v1262, 0.0
    %v1662 = vadd.f32 %v1660, %v1661
    %v1663 = vsel %vm1545, %v1264, 0.0
    %v1664 = vadd.f32 %v1662, %v1663
    %v1665 = vsel %vm1545, %v1272, 0.0
    %v1666 = vadd.f32 %v1664, %v1665
    %v1667 = vsel %vm1545, %v1280, 0.0
    %v1668 = vadd.f32 %v1666, %v1667
    %v1669 = vsel %vm1545, %v1279, 0.0
    %v1670 = vadd.f32 %v1668, %v1669
    %v1671 = vsel %vm1545, %v1281, 0.0
    %v1672 = vadd.f32 %v1670, %v1671
    %v1673 = vsel %vm1545, %v1289, 0.0
    %v1674 = vadd.f32 %v1672, %v1673
    %v1675 = vsel %vm1545, %v1297, 0.0
    %v1676 = vadd.f32 %v1674, %v1675
    %v1677 = vsel %vm1545, %v1296, 0.0
    %v1678 = vadd.f32 %v1676, %v1677
    %v1679 = vsel %vm1545, %v1298, 0.0
    %v1680 = vadd.f32 %v1678, %v1679
    %v1681 = vsel %vm1545, %v1306, 0.0
    %v1682 = vadd.f32 %v1680, %v1681
    %v1683 = vsel %vm1545, %v1314, 0.0
    %v1684 = vadd.f32 %v1682, %v1683
    %v1685 = vsel %vm1545, %v1313, 0.0
    %v1686 = vadd.f32 %v1684, %v1685
    %v1687 = vsel %vm1545, %v1315, 0.0
    %v1688 = vadd.f32 %v1686, %v1687
    %v1689 = vsel %vm1545, %v1323, 0.0
    %v1690 = vadd.f32 %v1688, %v1689
    %v1691 = vsel %vm1545, %v1331, 0.0
    %v1692 = vadd.f32 %v1690, %v1691
    %v1693 = vsel %vm1545, %v1330, 0.0
    %v1694 = vadd.f32 %v1692, %v1693
    %v1695 = vsel %vm1545, %v1332, 0.0
    %v1696 = vadd.f32 %v1694, %v1695
    %v1697 = vsel %vm1545, %v1340, 0.0
    %v1698 = vadd.f32 %v1696, %v1697
    %v1699 = vsel %vm1545, %v1348, 0.0
    %v1700 = vadd.f32 %v1698, %v1699
    %v1701 = vsel %vm1545, %v1347, 0.0
    %v1702 = vadd.f32 %v1700, %v1701
    %v1703 = vsel %vm1545, %v1349, 0.0
    %v1704 = vadd.f32 %v1702, %v1703
    %v1705 = vsel %vm1545, %v1357, 0.0
    %v1706 = vadd.f32 %v1704, %v1705
    %v1707 = vsel %vm1545, %v1365, 0.0
    %v1708 = vadd.f32 %v1706, %v1707
    %v1709 = vsel %vm1545, %v1364, 0.0
    %v1710 = vadd.f32 %v1708, %v1709
    %v1711 = vsel %vm1545, %v1366, 0.0
    %v1712 = vadd.f32 %v1710, %v1711
    %v1713 = vsel %vm1545, %v1374, 0.0
    %v1714 = vadd.f32 %v1712, %v1713
    %v1715 = vsel %vm1545, %v1382, 0.0
    %v1716 = vadd.f32 %v1714, %v1715
    %v1717 = vsel %vm1545, %v1381, 0.0
    %v1718 = vadd.f32 %v1716, %v1717
    %v1719 = vsel %vm1545, %v1383, 0.0
    %v1720 = vadd.f32 %v1718, %v1719
    %v1721 = vsel %vm1545, %v1391, 0.0
    %v1722 = vadd.f32 %v1720, %v1721
    %v1723 = vsel %vm1545, %v1399, 0.0
    %v1724 = vadd.f32 %v1722, %v1723
    %v1725 = vsel %vm1545, %v1398, 0.0
    %v1726 = vadd.f32 %v1724, %v1725
    %v1727 = vsel %vm1545, %v1400, 0.0
    %v1728 = vadd.f32 %v1726, %v1727
    %v1729 = vsel %vm1545, %v1408, 0.0
    %v1730 = vadd.f32 %v1728, %v1729
    %v1731 = vsel %vm1545, %v1416, 0.0
    %v1732 = vadd.f32 %v1730, %v1731
    %v1733 = vsel %vm1545, %v1415, 0.0
    %v1734 = vadd.f32 %v1732, %v1733
    %v1735 = vsel %vm1545, %v1417, 0.0
    %v1736 = vadd.f32 %v1734, %v1735
    %v1737 = vsel %vm1545, %v1425, 0.0
    %v1738 = vadd.f32 %v1736, %v1737
    %v1739 = vsel %vm1545, %v1433, 0.0
    %v1740 = vadd.f32 %v1738, %v1739
    %v1741 = vsel %vm1545, %v1432, 0.0
    %v1742 = vadd.f32 %v1740, %v1741
    %v1743 = vsel %vm1545, %v1434, 0.0
    %v1744 = vadd.f32 %v1742, %v1743
    %v1745 = vsel %vm1545, %v1441, 0.0
    %v1746 = vadd.f32 %v1744, %v1745
    %v1747 = vsel %vm1545, %v1442, 0.0
    %v1748 = vadd.f32 %v1746, %v1747
    %1749 = vadd.xlane.f32.xlu0 %v1748
    %v1750 = vpop.xlane.xlu0 %1749
    %s1751 = sld [smem:[#allocation2]]
    %v1752 = vstv %s1751
    %v1753 = vadd.f32 %v1750, %v1752
    %v1754 = vtanh.pop %v1753
    %vm1755 = vcmask 1024
    %1756 = vst.msk [vmem:[%s3] sm:$0x3] %vm1755, %v1754
    // Predicated region
    $region22: #{tpu_custom_call.1} parent=1 // pred_check
      _
    $region23: #{tpu_custom_call.1} parent=1 // pred_check_branch
      %1758 = sbr.rel (0) target = $region25
    $region24: #{tpu_custom_call.1} parent=1 // pred_region
      _
    $region25: #{tpu_custom_call.1} parent=1 // pred_fallthru
      _
    // Predicated region
    $region26: #{tpu_custom_call.1} parent=1 // pred_check
      _
    $region27: #{tpu_custom_call.1} parent=1 // pred_check_branch
      %1760 = sbr.rel (0) target = $region29
    $region28: #{tpu_custom_call.1} parent=1 // pred_region
      _
    $region29: #{tpu_custom_call.1} parent=1 // pred_fallthru
      _
    %1761 = vsyncpa [#allocation4], 1
    %1762 = vsyncpa [#allocation6], 1

</llo_original>
